<compile_context>
chip_gen: v5e
topology: v5e:2x2
jax: 0.10.0
libtpu: 0.0.40
codegen_flags: <defaults>
</compile_context>

<pallas_src>
import functools

import jax
import jax.numpy as jnp
from jax.experimental import pallas as pl
from jax.experimental.pallas import tpu as pltpu


def _round_up_128(n):
    return ((n + 127) // 128) * 128


def _ce_kernel(x_ref, t_ref, ce_ref, cnt_ref, *, ignore_index, hw, tile):
    p = pl.program_id(1)

    x = x_ref[0].astype(jnp.float32)     # (C, TILE) -- pixels in lane dim
    t = t_ref[0]                         # (1, TILE) int32 targets

    # Validity: in-range pixel (ragged tail of the unpadded HW axis) AND not ignore_index.
    pix = p * tile + jax.lax.broadcasted_iota(jnp.int32, (1, tile), 1)
    in_range = pix < hw                                      # (1, TILE)
    valid = jnp.logical_and(in_range, t != ignore_index)     # (1, TILE)
    validf = valid.astype(jnp.float32)

    # Sanitize out-of-range lanes (last block may read undefined padding) so no NaN/Inf leaks.
    x = jnp.where(in_range, x, 0.0)                          # (C, TILE)

    # Cross-entropy over the class (sublane) axis, numerically stable & fused:
    #   ce = m + log(sum_c exp(x_c - m)) - x[target]
    m = jnp.max(x, axis=0, keepdims=True)                    # (1, TILE)
    s = jnp.sum(jnp.exp(x - m), axis=0, keepdims=True)       # (1, TILE)
    cls = jax.lax.broadcasted_iota(jnp.int32, x.shape, 0)    # (C, TILE) class ids
    x_t = jnp.sum(jnp.where(cls == t, x, 0.0), axis=0, keepdims=True)  # (1, TILE)
    ce_row = (m + jnp.log(s) - x_t) * validf                 # (1, TILE)

    # Lane-dense per-tile partial sums: fold TILE lanes into 128 lanes with
    # aligned static slices (pure VPU adds, no relayout); final sum in wrapper.
    ce_acc = jnp.zeros((1, 128), jnp.float32)
    cnt_acc = jnp.zeros((1, 128), jnp.float32)
    for j in range(tile // 128):
        sl = slice(j * 128, (j + 1) * 128)
        ce_acc = ce_acc + ce_row[:, sl]
        cnt_acc = cnt_acc + validf[:, sl]

    ce_ref[...] = ce_acc.reshape(1, 1, 1, 128)
    cnt_ref[...] = cnt_acc.reshape(1, 1, 1, 128)


def cross_entropy_mean(logits_nchw, targets, *, ignore_index=-1, max_tile=8192):
    """NLLLoss(log_softmax(logits, dim=1), targets) with reduction='mean'."""
    B, C, H, W = logits_nchw.shape
    hw = H * W
    x = logits_nchw.reshape(B, C, hw)                 # free reshape, keep input dtype (bf16 OK)
    t = targets.reshape(B, 1, hw).astype(jnp.int32)   # tiny array

    tile = min(max_tile, _round_up_128(hw))           # multiple of 128, up to 8K pixels/step
    n_p = pl.cdiv(hw, tile)

    kernel = functools.partial(_ce_kernel, ignore_index=ignore_index, hw=hw, tile=tile)

    ce_part, cnt_part = pl.pallas_call(
        kernel,
        out_shape=(jax.ShapeDtypeStruct((B, n_p, 1, 128), jnp.float32),
                   jax.ShapeDtypeStruct((B, n_p, 1, 128), jnp.float32)),
        grid_spec=pltpu.PrefetchScalarGridSpec(
            num_scalar_prefetch=0,
            grid=(B, n_p),
            in_specs=[
                pl.BlockSpec((1, C, tile), lambda b, p: (b, 0, p)),   # (C, TILE) logits tile
                pl.BlockSpec((1, 1, tile), lambda b, p: (b, 0, p)),   # (1, TILE) targets row
            ],
            out_specs=[
                pl.BlockSpec((1, 1, 1, 128), lambda b, p: (b, p, 0, 0)),
                pl.BlockSpec((1, 1, 1, 128), lambda b, p: (b, p, 0, 0)),
            ],
        ),
        compiler_params=pltpu.CompilerParams(
            dimension_semantics=("parallel", "parallel")),
    )(x, t)

    cnt = jnp.sum(cnt_part)
    # NOTE: if every target == ignore_index this is 0/0 -> NaN, matching PyTorch NLLLoss.
    return jnp.sum(ce_part) / cnt


def seg_ta_loss(feat, mask, teacher_feat, pseudo, epoch, *,
                alpha=1.0, w=0.5, use_curriculum=False):
    """Forward pass of SegTALoss (teacher_feat is unused, as in the PyTorch module)."""
    del teacher_feat
    loss = cross_entropy_mean(feat, pseudo, ignore_index=-1)
    if use_curriculum:
        # TODO(synk): fuse both CE terms into a single kernel pass over `feat` (single HBM read).
        gt_term = alpha * cross_entropy_mean(feat, mask, ignore_index=-1)
        T = 120.0
        w_eff = epoch / T * (1.0 - w) + w
        loss = w_eff * loss + (1.0 - w_eff) * gt_term
    return loss


# ------------------------- pure-JAX reference -------------------------

def _reference_ce(logits, targets, ignore_index=-1):
    B, C, H, W = logits.shape
    x = jnp.transpose(logits, (0, 2, 3, 1)).reshape(-1, C).astype(jnp.float32)
    t = targets.reshape(-1).astype(jnp.int32)
    valid = (t != ignore_index)
    t_safe = jnp.where(valid, t, 0)
    logp = jax.nn.log_softmax(x, axis=1)
    ce_per = -jnp.take_along_axis(logp, t_safe[:, None], axis=1)[:, 0]
    vf = valid.astype(jnp.float32)
    return jnp.sum(ce_per * vf) / jnp.sum(vf)


def _reference_seg_ta_loss(feat, mask, teacher_feat, pseudo, epoch, *,
                           alpha=1.0, w=0.5, use_curriculum=False):
    del teacher_feat
    loss = _reference_ce(feat, pseudo, ignore_index=-1)
    if use_curriculum:
        gt_term = alpha * _reference_ce(feat, mask, ignore_index=-1)
        T = 120.0
        w_eff = epoch / T * (1.0 - w) + w
        loss = w_eff * loss + (1.0 - w_eff) * gt_term
    return loss


if __name__ == "__main__":
    B, C, H, W = 2, 4, 16, 16

    key = jax.random.PRNGKey(0)
    k1, k2, k3, k4 = jax.random.split(key, 4)
    feat = jax.random.normal(k1, (B, C, H, W), dtype=jnp.float32)
    teacher_feat = jax.random.normal(k2, (B, C, H, W), dtype=jnp.float32)  # unused by forward
    pseudo = jax.random.randint(k3, (B, H, W), 0, C, dtype=jnp.int32)
    mask = jax.random.randint(k4, (B, H, W), 0, C, dtype=jnp.int32)
    # exercise ignore_index=-1 masking
    pseudo = pseudo.at[0, 0, 0].set(-1).at[1, 7, 3].set(-1)
    mask = mask.at[1, 3, 5].set(-1)

    # default path: use_curriculum=False -> plain CE(feat, pseudo)
    loss = seg_ta_loss(feat, mask, teacher_feat, pseudo, epoch=0)
    loss = jax.block_until_ready(loss)
    ref = _reference_seg_ta_loss(feat, mask, teacher_feat, pseudo, epoch=0)
    assert jnp.allclose(loss, ref, rtol=1e-5, atol=1e-5), (loss, ref)

    # curriculum path
    loss_c = seg_ta_loss(feat, mask, teacher_feat, pseudo, epoch=30,
                         alpha=1.0, w=0.5, use_curriculum=True)
    loss_c = jax.block_until_ready(loss_c)
    ref_c = _reference_seg_ta_loss(feat, mask, teacher_feat, pseudo, epoch=30,
                                   alpha=1.0, w=0.5, use_curriculum=True)
    assert jnp.allclose(loss_c, ref_c, rtol=1e-5, atol=1e-5), (loss_c, ref_c)

    print("KERNEL_OK")
</pallas_src>

<mosaic_0001>
module attributes {stable_mosaic.version = 11 : i64} {
  func.func @_ce_kernel(%arg0: i32, %arg1: i32, %arg2: memref<1x4x256xf32, #tpu.memory_space<vmem>>, %arg3: memref<1x1x256xi32, #tpu.memory_space<vmem>>, %arg4: memref<1x1x1x128xf32, #tpu.memory_space<vmem>>, %arg5: memref<1x1x1x128xf32, #tpu.memory_space<vmem>>) attributes {dimension_semantics = [#tpu.dimension_semantics<parallel>, #tpu.dimension_semantics<parallel>], iteration_bounds = array<i64: 2, 1>, scalar_prefetch = 0 : i64, scratch_operands = 0 : i64, tpu.core_type = #tpu.core_type<tc>, window_params = [{transform_indices = @transform_0, window_bounds = array<i64: 1, 4, 256>}, {transform_indices = @transform_1, window_bounds = array<i64: 1, 1, 256>}, {transform_indices = @transform_2, window_bounds = array<i64: 1, 1, 1, 128>}, {transform_indices = @transform_3, window_bounds = array<i64: 1, 1, 1, 128>}]} {
    %c0 = arith.constant 0 : index
    %c0_0 = arith.constant 0 : index
    %c0_1 = arith.constant 0 : index
    %0 = vector.load %arg2[%c0, %c0_0, %c0_1] : memref<1x4x256xf32, #tpu.memory_space<vmem>>, vector<1x4x256xf32>
    %1 = vector.shape_cast %0 : vector<1x4x256xf32> to vector<4x256xf32>
    %c0_2 = arith.constant 0 : index
    %c0_3 = arith.constant 0 : index
    %c0_4 = arith.constant 0 : index
    %2 = vector.load %arg3[%c0_2, %c0_3, %c0_4] : memref<1x1x256xi32, #tpu.memory_space<vmem>>, vector<1x1x256xi32>
    %3 = vector.shape_cast %2 : vector<1x1x256xi32> to vector<1x256xi32>
    %c256_i32 = arith.constant 256 : i32
    %4 = arith.muli %arg1, %c256_i32 : i32
    %5 = tpu.iota {dimensions = array<i32: 1>} : vector<1x256xi32>
    %6 = vector.broadcast %4 : i32 to vector<1x256xi32>
    %7 = arith.addi %6, %5 : vector<1x256xi32>
    %c256_i32_5 = arith.constant 256 : i32
    %8 = vector.broadcast %c256_i32_5 : i32 to vector<1x256xi32>
    %9 = arith.cmpi slt, %7, %8 : vector<1x256xi32>
    %c-1_i32 = arith.constant -1 : i32
    %10 = vector.broadcast %c-1_i32 : i32 to vector<1x256xi32>
    %11 = arith.cmpi ne, %3, %10 : vector<1x256xi32>
    %12 = arith.andi %9, %11 : vector<1x256xi1>
    %13 = arith.extui %12 : vector<1x256xi1> to vector<1x256xi32>
    %14 = arith.sitofp %13 : vector<1x256xi32> to vector<1x256xf32>
    %cst = arith.constant 0.000000e+00 : f32
    %15 = vector.shape_cast %9 : vector<1x256xi1> to vector<1x256xi1>
    %16 = vector.broadcast %15 : vector<1x256xi1> to vector<4x256xi1>
    %17 = vector.broadcast %cst : f32 to vector<4x256xf32>
    %18 = arith.select %16, %1, %17 : vector<4x256xi1>, vector<4x256xf32>
    %cst_6 = arith.constant dense<0xFF800000> : vector<256xf32>
    %19 = vector.multi_reduction <maximumf>, %18, %cst_6 [0] : vector<4x256xf32> to vector<256xf32>
    %20 = vector.shape_cast %19 : vector<256xf32> to vector<1x256xf32>
    %21 = vector.broadcast %20 : vector<1x256xf32> to vector<4x256xf32>
    %22 = arith.subf %18, %21 : vector<4x256xf32>
    %23 = math.exp %22 : vector<4x256xf32>
    %cst_7 = arith.constant dense<0.000000e+00> : vector<256xf32>
    %24 = vector.multi_reduction <add>, %23, %cst_7 [0] : vector<4x256xf32> to vector<256xf32>
    %25 = vector.shape_cast %24 : vector<256xf32> to vector<1x256xf32>
    %26 = tpu.iota {dimensions = array<i32: 0>} : vector<4x256xi32>
    %27 = vector.broadcast %3 : vector<1x256xi32> to vector<4x256xi32>
    %28 = arith.cmpi eq, %26, %27 : vector<4x256xi32>
    %cst_8 = arith.constant 0.000000e+00 : f32
    %29 = vector.broadcast %cst_8 : f32 to vector<4x256xf32>
    %30 = arith.select %28, %18, %29 : vector<4x256xi1>, vector<4x256xf32>
    %cst_9 = arith.constant dense<0.000000e+00> : vector<256xf32>
    %31 = vector.multi_reduction <add>, %30, %cst_9 [0] : vector<4x256xf32> to vector<256xf32>
    %32 = vector.shape_cast %31 : vector<256xf32> to vector<1x256xf32>
    %33 = math.log %25 : vector<1x256xf32>
    %34 = arith.addf %20, %33 : vector<1x256xf32>
    %35 = arith.subf %34, %32 : vector<1x256xf32>
    %36 = arith.mulf %35, %14 : vector<1x256xf32>
    %cst_10 = arith.constant 0.000000e+00 : f32
    %37 = vector.broadcast %cst_10 : f32 to vector<1x128xf32>
    %cst_11 = arith.constant 0.000000e+00 : f32
    %38 = vector.broadcast %cst_11 : f32 to vector<1x128xf32>
    %39 = vector.extract_strided_slice %36 {offsets = [0, 0], sizes = [1, 128], strides = [1, 1]} : vector<1x256xf32> to vector<1x128xf32>
    %40 = arith.addf %37, %39 : vector<1x128xf32>
    %41 = vector.extract_strided_slice %14 {offsets = [0, 0], sizes = [1, 128], strides = [1, 1]} : vector<1x256xf32> to vector<1x128xf32>
    %42 = arith.addf %38, %41 : vector<1x128xf32>
    %43 = vector.extract_strided_slice %36 {offsets = [0, 128], sizes = [1, 128], strides = [1, 1]} : vector<1x256xf32> to vector<1x128xf32>
    %44 = arith.addf %40, %43 : vector<1x128xf32>
    %45 = vector.extract_strided_slice %14 {offsets = [0, 128], sizes = [1, 128], strides = [1, 1]} : vector<1x256xf32> to vector<1x128xf32>
    %46 = arith.addf %42, %45 : vector<1x128xf32>
    %47 = vector.shape_cast %44 : vector<1x128xf32> to vector<1x1x1x128xf32>
    %c0_12 = arith.constant 0 : index
    %c0_13 = arith.constant 0 : index
    %c0_14 = arith.constant 0 : index
    %c0_15 = arith.constant 0 : index
    %48 = vector.load %arg4[%c0_12, %c0_13, %c0_14, %c0_15] : memref<1x1x1x128xf32, #tpu.memory_space<vmem>>, vector<1x1x1x128xf32>
    tpu.vector_store %arg4[%c0_12, %c0_13, %c0_14, %c0_15], %47 {strides = array<i32>} : memref<1x1x1x128xf32, #tpu.memory_space<vmem>>, vector<1x1x1x128xf32>,
    %49 = vector.shape_cast %46 : vector<1x128xf32> to vector<1x1x1x128xf32>
    %c0_16 = arith.constant 0 : index
    %c0_17 = arith.constant 0 : index
    %c0_18 = arith.constant 0 : index
    %c0_19 = arith.constant 0 : index
    %50 = vector.load %arg5[%c0_16, %c0_17, %c0_18, %c0_19] : memref<1x1x1x128xf32, #tpu.memory_space<vmem>>, vector<1x1x1x128xf32>
    tpu.vector_store %arg5[%c0_16, %c0_17, %c0_18, %c0_19], %49 {strides = array<i32>} : memref<1x1x1x128xf32, #tpu.memory_space<vmem>>, vector<1x1x1x128xf32>,
    return
  }
  func.func @transform_0(%arg0: i32, %arg1: i32) -> (i32, i32, i32) {
    %c0_i32 = arith.constant 0 : i32
    %c0_i32_0 = arith.constant 0 : i32
    return %arg0, %c0_i32, %arg1 : i32, i32, i32
  }
  func.func @transform_1(%arg0: i32, %arg1: i32) -> (i32, i32, i32) {
    %c0_i32 = arith.constant 0 : i32
    %c0_i32_0 = arith.constant 0 : i32
    return %arg0, %c0_i32, %arg1 : i32, i32, i32
  }
  func.func @transform_2(%arg0: i32, %arg1: i32) -> (i32, i32, i32, i32) {
    %c0_i32 = arith.constant 0 : i32
    %c0_i32_0 = arith.constant 0 : i32
    %c0_i32_1 = arith.constant 0 : i32
    return %arg0, %arg1, %c0_i32, %c0_i32_0 : i32, i32, i32, i32
  }
  func.func @transform_3(%arg0: i32, %arg1: i32) -> (i32, i32, i32, i32) {
    %c0_i32 = arith.constant 0 : i32
    %c0_i32_0 = arith.constant 0 : i32
    %c0_i32_1 = arith.constant 0 : i32
    return %arg0, %arg1, %c0_i32, %c0_i32_0 : i32, i32, i32, i32
  }
}

</mosaic_0001>

<llo_original>
// kernel: tpu_custom_call.1
$region0: #{tpu_custom_call.1}
  #allocation0 [shape = 'u32[]', space=smem, size = 0x4, offset = 0x4, fixed_abs, tag = 'smem constant byte address 0x4 - core index']
  #allocation1 [shape = 'u32[72,128]{1,0:T(1,128)}', space=vmem, size = 0x9000, scoped, tag = 'internal scratch']
  %s0 = inlined_call_operand.hbm [shape: f32[2,4,256], index: 0, kind: input, shape index: {}]
  %s1 = inlined_call_operand.hbm [shape: s32[2,1,256], index: 1, kind: input, shape index: {}]
  %s2 = inlined_call_operand.hbm [shape: f32[2,1,1,128], index: 2, kind: output, shape index: {0}]
  %s3 = inlined_call_operand.hbm [shape: f32[2,1,1,128], index: 3, kind: output, shape index: {1}]
  %4 = xla_tuple %s2, %s3
  %s5 = sld [smem:[#allocation0]]
  $region57: #{tpu_custom_call.1} parent=0
    _
  %s7 = ssub.s32 1, %s5
  %s8 = scalar_select 0, %s7, %s5
  $region1: #{tpu_custom_call.1} parent=0
    #allocation2 [shape = 'u8[8192]{0}', space=vmem, size = 0x2000, scoped, tag = 'input window, operand 0']
    #allocation3 [shape = 's32[2]{0}', space=sflag, size = 0x8, scoped, tag = 'scoped memory for tpu_custom_call.1']
    #allocation4 [shape = 's32[2]{0}', space=sflag, size = 0x8, scoped, tag = 'scoped memory for tpu_custom_call.1']
    #allocation5 [shape = 'u8[2048]{0}', space=vmem, size = 0x800, scoped, tag = 'input window, operand 1']
    #allocation6 [shape = 's32[2]{0}', space=sflag, size = 0x8, scoped, tag = 'scoped memory for tpu_custom_call.1']
    #allocation7 [shape = 'u8[1024]{0}', space=vmem, size = 0x400, scoped, tag = 'output window, operand 0']
    #allocation8 [shape = 'u8[1024]{0}', space=vmem, size = 0x400, scoped, tag = 'output window, operand 1']
    #allocation9 [shape = 's32[2]{0}', space=sflag, size = 0x8, scoped, tag = 'scoped memory for tpu_custom_call.1']
    %9 = vsyncpa [#allocation3], 0
    %s10 = scalar_lea.sflag [#allocation3], 1
    %11 = vsyncpa %s10, 0
    %12 = vsyncpa [#allocation6], 0
    %s13 = scalar_lea.sflag [#allocation6], 1
    %14 = vsyncpa %s13, 0
    %15 = vsyncpa [#allocation4], 0
    %s16 = scalar_lea.sflag [#allocation4], 1
    %17 = vsyncpa %s16, 0
    %18 = vsyncpa [#allocation9], 0
    %s19 = scalar_lea.sflag [#allocation9], 1
    %20 = vsyncpa %s19, 0
    loop: start=0, step=1, limit=4
    $region2: #{tpu_custom_call.1} parent=1 // loop_pre_header
      _
    $region3: #{tpu_custom_call.1} parent=1 // loop_header
      %s22 = sphi 0, %s26
      %p23 = scmp.ge.s32.totalorder %s22, 4
      %s29 = sphi 0, %s41
      %s30 = sphi 0, %s37
      %s31 = sphi 0, %s29
      %s32 = sphi 0, %s30
      %s33 = sphi 0, %s31
      %s34 = sphi 0, %s32
      %s46 = sphi 0, %s48
      %s49 = sphi 0, %s46
      %s50 = sphi 0, %s49
      %s66 = sphi 0, %s50
      %s74 = sphi 0, %s76
      %s77 = sphi 0, %s74
      %s78 = sphi 0, %s77
      %s94 = sphi 0, %s78
      %s102 = sphi 0, %s104
      %s105 = sphi 0, %s102
      %s106 = sphi 0, %s105
      %s122 = sphi 0, %s106
      %s130 = sphi 0, %s132
      %s133 = sphi 0, %s130
      %s134 = sphi 0, %s133
      %s150 = sphi 0, %s134
    $region4: #{tpu_custom_call.1} parent=1 // loop_header_branch
      %25 = sbr.rel (%p23) target = $region8
    $region5: #{tpu_custom_call.1} parent=1 // loop_body
      %s27 = ssub.s32 %s22, 1
      %s28 = ssub.s32 %s22, 2
      %s35 = sadd.s32 1, %s30
      %p36 = scmp.ge.s32.totalorder %s35, 1
      %s37 = scalar_select %p36, 0, %s35
      %s38 = sadd.s32 1, %s29
      %s39 = scalar_select %p36, %s38, %s29
      %p40 = scmp.ge.s32.totalorder %s39, 2
      %s41 = scalar_select %p40, 0, %s39
      %s42 = ssub.s32 %s29, %s41
      %s43 = ssub.s32 %s30, %s37
      %s44 = sor.u32 %s42, %s43
      %p45 = scmp.eq.s32.totalorder %s44, 0
      %s47 = sadd.s32 %s46, 1
      %s48 = scalar_select %p45, %s46, %s47
      %p51 = pneg %p45
      %p52 = scmp.eq.s32.totalorder %s22, 1
      %p53 = por %p51, %p52
      %p54 = scmp.ne.s32.totalorder %s46, %s49
      %p55 = scmp.eq.s32.totalorder %s22, 0
      %p56 = por %p54, %p55
      %p57 = scmp.ne.s32.totalorder %s46, %s49
      %p58 = scmp.eq.s32.totalorder %s27, 1
      %p59 = por %p57, %p58
      %p60 = scmp.ne.s32.totalorder %s49, %s50
      %p61 = scmp.eq.s32.totalorder %s27, 0
      %p62 = por %p60, %p61
      %p63 = scmp.ne.s32.totalorder %s49, %s50
      %p64 = scmp.eq.s32.totalorder %s28, 1
      %p65 = por %p63, %p64
      %p67 = scmp.ne.s32.totalorder %s50, %s66
      %p68 = scmp.eq.s32.totalorder %s28, 0
      %p69 = por %p67, %p68
      %s70 = ssub.s32 %s29, %s41
      %s71 = ssub.s32 %s30, %s37
      %s72 = sor.u32 %s70, %s71
      %p73 = scmp.eq.s32.totalorder %s72, 0
      %s75 = sadd.s32 %s74, 1
      %s76 = scalar_select %p73, %s74, %s75
      %p79 = pneg %p73
      %p80 = scmp.eq.s32.totalorder %s22, 1
      %p81 = por %p79, %p80
      %p82 = scmp.ne.s32.totalorder %s74, %s77
      %p83 = scmp.eq.s32.totalorder %s22, 0
      %p84 = por %p82, %p83
      %p85 = scmp.ne.s32.totalorder %s74, %s77
      %p86 = scmp.eq.s32.totalorder %s27, 1
      %p87 = por %p85, %p86
      %p88 = scmp.ne.s32.totalorder %s77, %s78
      %p89 = scmp.eq.s32.totalorder %s27, 0
      %p90 = por %p88, %p89
      %p91 = scmp.ne.s32.totalorder %s77, %s78
      %p92 = scmp.eq.s32.totalorder %s28, 1
      %p93 = por %p91, %p92
      %p95 = scmp.ne.s32.totalorder %s78, %s94
      %p96 = scmp.eq.s32.totalorder %s28, 0
      %p97 = por %p95, %p96
      %s98 = ssub.s32 %s29, %s41
      %s99 = ssub.s32 %s30, %s37
      %s100 = sor.u32 %s98, %s99
      %p101 = scmp.eq.s32.totalorder %s100, 0
      %s103 = sadd.s32 %s102, 1
      %s104 = scalar_select %p101, %s102, %s103
      %p107 = pneg %p101
      %p108 = scmp.eq.s32.totalorder %s22, 1
      %p109 = por %p107, %p108
      %p110 = scmp.ne.s32.totalorder %s102, %s105
      %p111 = scmp.eq.s32.totalorder %s22, 0
      %p112 = por %p110, %p111
      %p113 = scmp.ne.s32.totalorder %s102, %s105
      %p114 = scmp.eq.s32.totalorder %s27, 1
      %p115 = por %p113, %p114
      %p116 = scmp.ne.s32.totalorder %s105, %s106
      %p117 = scmp.eq.s32.totalorder %s27, 0
      %p118 = por %p116, %p117
      %p119 = scmp.ne.s32.totalorder %s105, %s106
      %p120 = scmp.eq.s32.totalorder %s28, 1
      %p121 = por %p119, %p120
      %p123 = scmp.ne.s32.totalorder %s106, %s122
      %p124 = scmp.eq.s32.totalorder %s28, 0
      %p125 = por %p123, %p124
      %s126 = ssub.s32 %s29, %s41
      %s127 = ssub.s32 %s30, %s37
      %s128 = sor.u32 %s126, %s127
      %p129 = scmp.eq.s32.totalorder %s128, 0
      %s131 = sadd.s32 %s130, 1
      %s132 = scalar_select %p129, %s130, %s131
      %p135 = pneg %p129
      %p136 = scmp.eq.s32.totalorder %s22, 1
      %p137 = por %p135, %p136
      %p138 = scmp.ne.s32.totalorder %s130, %s133
      %p139 = scmp.eq.s32.totalorder %s22, 0
      %p140 = por %p138, %p139
      %p141 = scmp.ne.s32.totalorder %s130, %s133
      %p142 = scmp.eq.s32.totalorder %s27, 1
      %p143 = por %p141, %p142
      %p144 = scmp.ne.s32.totalorder %s133, %s134
      %p145 = scmp.eq.s32.totalorder %s27, 0
      %p146 = por %p144, %p145
      %p147 = scmp.ne.s32.totalorder %s133, %s134
      %p148 = scmp.eq.s32.totalorder %s28, 1
      %p149 = por %p147, %p148
      %p151 = scmp.ne.s32.totalorder %s134, %s150
      %p152 = scmp.eq.s32.totalorder %s28, 0
      %p153 = por %p151, %p152
      %p154 = scmp.le.s32.totalorder 1, %s22
      %p155 = scmp.lt.s32.totalorder %s22, 3
      %p156 = pnand %p154, %p155
      %p157 = pneg %p156
      // Predicated region
      $region9: #{tpu_custom_call.1} parent=5 // pred_check
        _
      $region10: #{tpu_custom_call.1} parent=5 // pred_check_branch
        %159 = sbr.rel (%p156) target = $region12
      $region11: #{tpu_custom_call.1} parent=5 // pred_region
        %s160 = ssub.s32 %s22, 1
      $region12: #{tpu_custom_call.1} parent=5 // pred_fallthru
        _
      %p161 = scmp.lt.s32.totalorder %s22, 2
      // Predicated region
      $region13: #{tpu_custom_call.1} parent=5 // pred_check
        %p162 = pneg %p161
      $region14: #{tpu_custom_call.1} parent=5 // pred_check_branch
        %164 = sbr.rel (%p162) target = $region16
      $region15: #{tpu_custom_call.1} parent=5 // pred_region
        // Predicated region
        $region17: #{tpu_custom_call.1} parent=15 // pred_check
          %p165 = pneg %p56
        $region18: #{tpu_custom_call.1} parent=15 // pred_check_branch
          %167 = sbr.rel (%p165) target = $region20
        $region19: #{tpu_custom_call.1} parent=15 // pred_region
          %s168 = sand.u32 %s46, 1
          %s169 = scalar_lea.sflag [#allocation3], %s168
          %s170 = sand.u32 %s46, 1
          %s171 = smul.addr %s170, 8
          %s172 = scalar_lea.vmem [#allocation2], %s171
          %s173 = smul.u32 2, %s30
          %175 = vsyncadd %s169, 0
          %s176 = smul.addr %s29, 2
          %s177 = sadd.s32 %s173, %s176
          %s178 = smul.addr %s177, 4
          %s179 = scalar_lea.hbm %s0, %s178
          %s181 = sshll.u32 %s179, 4
          %s182 = int_to_ptr.hbm [resolvable:$true] %s181
          %s183 = sshll.u32 %s172, 4
          %s184 = int_to_ptr.vmem [resolvable:$true] %s183
          %186 = dma.hbm_to_vmem [thread:$0]  %s182, 128, %s184, %s169
        $region20: #{tpu_custom_call.1} parent=15 // pred_fallthru
          _
        // Predicated region
        $region21: #{tpu_custom_call.1} parent=15 // pred_check
          %p187 = pneg %p84
        $region22: #{tpu_custom_call.1} parent=15 // pred_check_branch
          %189 = sbr.rel (%p187) target = $region24
        $region23: #{tpu_custom_call.1} parent=15 // pred_region
          %s190 = sand.u32 %s74, 1
          %s191 = scalar_lea.sflag [#allocation6], %s190
          %s192 = sand.u32 %s74, 1
          %s193 = smul.addr %s192, 2
          %s194 = scalar_lea.vmem [#allocation5], %s193
          %s195 = smul.u32 2, %s30
          %197 = vsyncadd %s191, 0
          %s198 = smul.addr %s29, 2
          %s199 = sadd.s32 %s195, %s198
          %s200 = scalar_lea.hbm %s1, %s199
          %s202 = sshll.u32 %s200, 4
          %s203 = int_to_ptr.hbm [resolvable:$true] %s202
          %s204 = sshll.u32 %s194, 4
          %s205 = int_to_ptr.vmem [resolvable:$true] %s204
          %207 = dma.hbm_to_vmem [thread:$0]  %s203, 32, %s205, %s191
        $region24: #{tpu_custom_call.1} parent=15 // pred_fallthru
          _
      $region16: #{tpu_custom_call.1} parent=5 // pred_fallthru
        _
      %p208 = scmp.le.s32.totalorder 1, %s22
      %p209 = scmp.lt.s32.totalorder %s22, 3
      %p210 = pnand %p208, %p209
      %p211 = pneg %p210
      // Predicated region
      $region25: #{tpu_custom_call.1} parent=5 // pred_check
        _
      $region26: #{tpu_custom_call.1} parent=5 // pred_check_branch
        %213 = sbr.rel (%p210) target = $region28
      $region27: #{tpu_custom_call.1} parent=5 // pred_region
        %s214 = ssub.s32 %s22, 1
        %s215 = sand.u32 %s49, 1
        %s216 = scalar_lea.sflag [#allocation3], %s215
        %s217 = sand.u32 %s49, 1
        %s218 = smul.addr %s217, 8
        %s219 = scalar_lea.vmem [#allocation2], %s218
        // Predicated region
        $region29: #{tpu_custom_call.1} parent=27 // pred_check
          %p220 = pneg %p62
        $region30: #{tpu_custom_call.1} parent=27 // pred_check_branch
          %222 = sbr.rel (%p220) target = $region32
        $region31: #{tpu_custom_call.1} parent=27 // pred_region
          %224 = dma.done %s216, 128
        $region32: #{tpu_custom_call.1} parent=27 // pred_fallthru
          _
        %s225 = sand.u32 %s77, 1
        %s226 = scalar_lea.sflag [#allocation6], %s225
        %s227 = sand.u32 %s77, 1
        %s228 = smul.addr %s227, 2
        %s229 = scalar_lea.vmem [#allocation5], %s228
        // Predicated region
        $region33: #{tpu_custom_call.1} parent=27 // pred_check
          %p230 = pneg %p90
        $region34: #{tpu_custom_call.1} parent=27 // pred_check_branch
          %232 = sbr.rel (%p230) target = $region36
        $region35: #{tpu_custom_call.1} parent=27 // pred_region
          %234 = dma.done %s226, 32
        $region36: #{tpu_custom_call.1} parent=27 // pred_fallthru
          _
        %s235 = sand.u32 %s49, 1
        %s236 = scalar_lea.sflag [#allocation3], %s235
        %s237 = sand.u32 %s49, 1
        %s238 = smul.addr %s237, 8
        %s239 = scalar_lea.vmem [#allocation2], %s238
        %p240 = pneg %p62
        %p241 = pneg %p59
        %s242 = sand.u32 %s77, 1
        %s243 = scalar_lea.sflag [#allocation6], %s242
        %s244 = sand.u32 %s77, 1
        %s245 = smul.addr %s244, 2
        %s246 = scalar_lea.vmem [#allocation5], %s245
        %p247 = pneg %p90
        %p248 = pneg %p87
        %p249 = pneg %p118
        %p250 = pneg %p115
        %s251 = sand.u32 %s105, 1
        %s252 = scalar_lea.sflag [#allocation4], %s251
        %s253 = sand.u32 %s105, 1
        %s254 = scalar_lea.vmem [#allocation7], %s253
        %p255 = pneg %p146
        %p256 = pneg %p143
        %s257 = sand.u32 %s133, 1
        %s258 = scalar_lea.sflag [#allocation9], %s257
        %s259 = sand.u32 %s133, 1
        %s260 = scalar_lea.vmem [#allocation8], %s259
        %s261 = smul.u32 2, %s32
        %s262 = smul.u32 2, %s32
        %v263 = vld [vmem:[%s219] sm:$0xff]
        %v264 = vld [vmem:[%s229] sm:$0x3]
        %s265 = smul.u32 %s32, 256
        %v266 = vlaneseq
        %v267 = vand.u32 %v266, 127
        %v268 = vadd.s32 %v267, 128
        %v269 = vstv %s265
        %v270 = vadd.s32 %v269, %v267
        %v271 = vadd.s32 %v269, %v268
        %vm272 = vcmp.lt.s32.totalorder %v270, 256
        %vm273 = vcmp.lt.s32.totalorder %v271, 256
        %vm274 = vcmp.ne.s32.totalorder %v264, 4294967295
        %v275 = vsel %vm274, 1, 0
        %v276 = vperm.slane %v275, 0
        %v277 = vperm.slane %v275, 1
        %vm278 = vcmp.ne.s32.totalorder %v276, 0
        %vm279 = vcmp.ne.s32.totalorder %v277, 0
        %vm280 = vmand %vm272, %vm278
        %vm281 = vmand %vm273, %vm279
        %v282 = vsel %vm280, 1, 0
        %v283 = vsel %vm281, 1, 0
        %v284 = vcvt.s32.f32 %v282
        %v285 = vcvt.s32.f32 %v283
        %v286 = vsel %vm272, 1, 0
        %v287 = vsel %vm273, 1, 0
        %vm288 = vcmp.eq.s32.totalorder %v286, 1
        %vm289 = vcmp.eq.s32.totalorder %v287, 1
        %291 = vst [vmem:[#allocation1] ss:$2 sm:$0xff] %v263
        %v292 = vld.sshfl [vmem:[#allocation1] sm:$0xff pattern:$0x75316420]
        %v293 = vld.sshfl [vmem:[#allocation1 + $0x8] sm:$0xff pattern:$0x75316420]
        %v296 = vsel %vm288, %v292, 0.0
        %v297 = vsel %vm289, %v293, 0.0
        %vm298 = vcmask 1043456
        %v299 = vsel %vm298, %v296, -inf
        %v300 = vrot.slane %v299, 4
        %v301 = vmax.f32 %v299, %v300
        %v302 = vrot.slane %v301, 2
        %v303 = vmax.f32 %v301, %v302
        %v304 = vrot.slane %v303, 1
        %v305 = vmax.f32 %v303, %v304
        %v306 = vsel %vm298, %v297, -inf
        %v307 = vrot.slane %v306, 4
        %v308 = vmax.f32 %v306, %v307
        %v309 = vrot.slane %v308, 2
        %v310 = vmax.f32 %v308, %v309
        %v311 = vrot.slane %v310, 1
        %v312 = vmax.f32 %v310, %v311
        %v313 = vsub.f32 %v296, %v305
        %v314 = vsub.f32 %v297, %v312
        %v315 = vmul.f32 %v313, 1.442695
        %v316 = vpow.pop %v315
        %v317 = vmul.f32 %v314, 1.442695
        %v318 = vpow.pop %v317
        %v319 = vsel %vm298, %v316, 0.0
        %v320 = vrot.slane %v319, 4
        %v321 = vadd.f32 %v319, %v320
        %v322 = vrot.slane %v321, 2
        %v323 = vadd.f32 %v321, %v322
        %v324 = vrot.slane %v323, 1
        %v325 = vadd.f32 %v323, %v324
        %v326 = vsel %vm298, %v318, 0.0
        %v327 = vrot.slane %v326, 4
        %v328 = vadd.f32 %v326, %v327
        %v329 = vrot.slane %v328, 2
        %v330 = vadd.f32 %v328, %v329
        %v331 = vrot.slane %v330, 1
        %v332 = vadd.f32 %v330, %v331
        %v333 = vlaneseq
        %v334 = vshrl.u32 %v333, 7
        %v335 = vperm.slane %v264, 0
        %v336 = vperm.slane %v264, 1
        %vm337 = vcmp.eq.s32.totalorder %v334, %v335
        %vm338 = vcmp.eq.s32.totalorder %v334, %v336
        %v339 = vsel %vm337, %v296, 0.0
        %v340 = vsel %vm338, %v297, 0.0
        %v341 = vsel %vm298, %v339, 0.0
        %v342 = vrot.slane %v341, 4
        %v343 = vadd.f32 %v341, %v342
        %v344 = vrot.slane %v343, 2
        %v345 = vadd.f32 %v343, %v344
        %v346 = vrot.slane %v345, 1
        %v347 = vadd.f32 %v345, %v346
        %v348 = vsel %vm298, %v340, 0.0
        %v349 = vrot.slane %v348, 4
        %v350 = vadd.f32 %v348, %v349
        %v351 = vrot.slane %v350, 2
        %v352 = vadd.f32 %v350, %v351
        %v353 = vrot.slane %v352, 1
        %v354 = vadd.f32 %v352, %v353
        %v355 = vlog2.pop %v325
        %v356 = vmul.f32 %v355, 0.6931472
        %v357 = vlog2.pop %v332
        %v358 = vmul.f32 %v357, 0.6931472
        %v359 = vadd.f32 %v305, %v356
        %v360 = vadd.f32 %v312, %v358
        %v361 = vsub.f32 %v359, %v347
        %v362 = vsub.f32 %v360, %v354
        %v363 = vmul.f32 %v361, %v284
        %v364 = vmul.f32 %v362, %v285
        %v365 = vadd.f32 %v363, 0.0
        %v366 = vadd.f32 %v284, 0.0
        %v367 = vadd.f32 %v365, %v364
        %v368 = vadd.f32 %v366, %v285
        %369 = vst [vmem:[%s254] sm:$0x1] %v367
        %370 = vst [vmem:[%s260] sm:$0x1] %v368
        %s371 = sand.u32 %s105, 1
        %s372 = scalar_lea.sflag [#allocation4], %s371
        %s373 = sand.u32 %s105, 1
        %s374 = scalar_lea.vmem [#allocation7], %s373
        %s375 = sand.u32 %s133, 1
        %s376 = scalar_lea.sflag [#allocation9], %s375
        %s377 = sand.u32 %s133, 1
        %s378 = scalar_lea.vmem [#allocation8], %s377
        // Predicated region
        $region37: #{tpu_custom_call.1} parent=27 // pred_check
          %p379 = pneg %p115
        $region38: #{tpu_custom_call.1} parent=27 // pred_check_branch
          %381 = sbr.rel (%p379) target = $region40
        $region39: #{tpu_custom_call.1} parent=27 // pred_region
          %383 = vsyncadd %s372, 0
          %s384 = sadd.s32 %s32, %s31
          %s385 = scalar_lea.hbm %s2, %s384
          %s387 = sshll.u32 %s374, 4
          %s388 = int_to_ptr.vmem [resolvable:$true] %s387
          %s389 = sshll.u32 %s385, 4
          %s390 = int_to_ptr.hbm [resolvable:$true] %s389
          %392 = dma.vmem_to_hbm [thread:$0]  %s388, 16, %s390, %s372
        $region40: #{tpu_custom_call.1} parent=27 // pred_fallthru
          _
        // Predicated region
        $region41: #{tpu_custom_call.1} parent=27 // pred_check
          %p393 = pneg %p143
        $region42: #{tpu_custom_call.1} parent=27 // pred_check_branch
          %395 = sbr.rel (%p393) target = $region44
        $region43: #{tpu_custom_call.1} parent=27 // pred_region
          %397 = vsyncadd %s376, 0
          %s398 = sadd.s32 %s32, %s31
          %s399 = scalar_lea.hbm %s3, %s398
          %s401 = sshll.u32 %s378, 4
          %s402 = int_to_ptr.vmem [resolvable:$true] %s401
          %s403 = sshll.u32 %s399, 4
          %s404 = int_to_ptr.hbm [resolvable:$true] %s403
          %406 = dma.vmem_to_hbm [thread:$0]  %s402, 16, %s404, %s376
        $region44: #{tpu_custom_call.1} parent=27 // pred_fallthru
          _
      $region28: #{tpu_custom_call.1} parent=5 // pred_fallthru
        _
      %p407 = scmp.le.s32.totalorder 2, %s22
      // Predicated region
      $region45: #{tpu_custom_call.1} parent=5 // pred_check
        %p408 = pneg %p407
      $region46: #{tpu_custom_call.1} parent=5 // pred_check_branch
        %410 = sbr.rel (%p408) target = $region48
      $region47: #{tpu_custom_call.1} parent=5 // pred_region
        %s411 = ssub.s32 %s22, 2
        // Predicated region
        $region49: #{tpu_custom_call.1} parent=47 // pred_check
          %p412 = pneg %p121
        $region50: #{tpu_custom_call.1} parent=47 // pred_check_branch
          %414 = sbr.rel (%p412) target = $region52
        $region51: #{tpu_custom_call.1} parent=47 // pred_region
          %s415 = sand.u32 %s106, 1
          %s416 = scalar_lea.sflag [#allocation4], %s415
          %s417 = sand.u32 %s106, 1
          %s418 = scalar_lea.vmem [#allocation7], %s417
          %420 = dma.done %s416, 16
        $region52: #{tpu_custom_call.1} parent=47 // pred_fallthru
          _
        // Predicated region
        $region53: #{tpu_custom_call.1} parent=47 // pred_check
          %p421 = pneg %p149
        $region54: #{tpu_custom_call.1} parent=47 // pred_check_branch
          %423 = sbr.rel (%p421) target = $region56
        $region55: #{tpu_custom_call.1} parent=47 // pred_region
          %s424 = sand.u32 %s134, 1
          %s425 = scalar_lea.sflag [#allocation9], %s424
          %s426 = sand.u32 %s134, 1
          %s427 = scalar_lea.vmem [#allocation8], %s426
          %429 = dma.done %s425, 16
        $region56: #{tpu_custom_call.1} parent=47 // pred_fallthru
          _
      $region48: #{tpu_custom_call.1} parent=5 // pred_fallthru
        _
    $region6: #{tpu_custom_call.1} parent=1 // loop_footer
      %s26 = sadd.s32 1, %s22
    $region7: #{tpu_custom_call.1} parent=1 // loop_footer_branch
      %21 = sbr.rel target = $region3
    $region8: #{tpu_custom_call.1} parent=1 // loop_exit
      _
    %430 = vsyncpa [#allocation3], 1
    %s431 = scalar_lea.sflag [#allocation3], 1
    %432 = vsyncpa %s431, 1
    %433 = vsyncpa [#allocation6], 1
    %s434 = scalar_lea.sflag [#allocation6], 1
    %435 = vsyncpa %s434, 1
    %436 = vsyncpa [#allocation4], 1
    %s437 = scalar_lea.sflag [#allocation4], 1
    %438 = vsyncpa %s437, 1
    %439 = vsyncpa [#allocation9], 1
    %s440 = scalar_lea.sflag [#allocation9], 1
    %441 = vsyncpa %s440, 1

</llo_original>
